<compile_context>
chip_gen: v6e
topology: v6e:2x2x1
jax: 0.10.0
libtpu: 0.0.40
codegen_flags: <defaults>
</compile_context>

<pallas_src>
import functools

import jax
import jax.numpy as jnp
from jax.experimental import pallas as pl
from jax.experimental.pallas import tpu as pltpu

POOL = 5          # MaxPool1d(5): window 5, stride 5, remainder time steps dropped
_LANE = 128       # lane-dense output multiple (unmasked vst)
_SUBLANE = 8      # sublane alignment for M / K dims


def _round_up(x, m):
    return -(-x // m) * m


def _num_tensorcores():
    """Best-effort TensorCore-per-device count (megacore sharding gate)."""
    try:
        dev = jax.devices()[0]
        n = getattr(dev, "num_cores", None)
        if not n:
            info = pltpu.get_tpu_info()
            n = (getattr(info, "num_cores", None)
                 or getattr(info, "tensorcores_per_chip", None))
        if n:
            return max(1, min(2, int(n)))
    except Exception:
        pass
    return 1


def _vmem_capacity_bytes():
    """Per-core VMEM capacity; conservative 64 MiB (v7x per-TC) fallback."""
    try:
        cap = int(pltpu.get_tpu_info().vmem_capacity_bytes)
        if cap > 0:
            return cap
    except Exception:
        pass
    return 64 * 1024 * 1024


def _fused_kernel(x_ref, w_ref, b_ref, o_ref, *, n_cols):
    """One batch tile: conv bank (merged weights) + MaxPool1d(5) + bias + ReLU.

    Ref shapes (per grid step):
      x_ref : (1, KD_pad, POOL * n_cols)   shared im2col, columns ordered (r, bt, p)
      w_ref : (F_pad, KD_pad)              merged, zero-padded filter bank
      b_ref : (F_pad, 1)                   biases
      o_ref : (1, F_pad, n_cols)           pooled activations, columns ordered (bt, p)
    """
    # Single MXU matmul for ALL filter widths; f32 accumulation.
    act = jnp.dot(w_ref[...], x_ref[0], preferred_element_type=jnp.float32)
    # MaxPool1d(5): pool offset r is the slowest column index, so the pool is a max
    # over POOL contiguous, lane-tile-aligned slabs of width n_cols (no lane shifts).
    pooled = act[:, 0:n_cols]
    for r in range(1, POOL):
        pooled = jnp.maximum(pooled, act[:, r * n_cols:(r + 1) * n_cols])
    # relu(x + b) is monotone, so bias + ReLU commute with the max.
    pooled = jnp.maximum(pooled + b_ref[...], 0.0)
    # One contiguous, lane-dense full-block store.
    o_ref[0] = pooled.astype(o_ref.dtype)


def cnn_encoder_forward(x4d, params, filter_widths, seq_len,
                        compute_dtype=jnp.bfloat16):
    """x4d: (B, 1, D, T) NCHW like the PyTorch module.
    params[i] = (W, b) with W in PyTorch Conv2d layout (F_k, 1, D, k), b of shape (F_k,).
    Returns (B, sum F_k, 1, T // 5) float32."""
    assert x4d.shape[1] == 1 and x4d.shape[3] == seq_len
    x = x4d[:, 0, :, :].astype(jnp.float32)               # (B, D, T)
    B, D, T = x.shape
    T_pool = T // POOL
    assert T_pool >= 1, "MaxPool1d(5) needs seq_len >= 5"
    T_eff = T_pool * POOL                                  # time steps that survive pooling

    widths = tuple(int(k) for k in filter_widths)
    f_sizes = tuple(int(W.shape[0]) for (W, _) in params)
    f_total = sum(f_sizes)
    k_max = max(widths)
    P = k_max // 2                                         # shared time padding
    KD = k_max * D
    KD_pad = _round_up(KD, _SUBLANE)                       # contraction dim, sublane aligned
    F_pad = _round_up(f_total, _SUBLANE)                   # output rows, sublane aligned
    itemsize = jnp.dtype(compute_dtype).itemsize

    # ---- VMEM-aware batch tiling (x2 double-buffering + matmul intermediate counted) ----
    def tile_bytes(bt):
        n_cols = _round_up(bt * T_pool, _LANE)
        x_t = KD_pad * POOL * n_cols * itemsize            # im2col tile
        o_t = F_pad * n_cols * 4                           # f32 output tile
        w_b = F_pad * KD_pad * itemsize                    # merged weights
        b_b = F_pad * 4                                    # bias
        act = F_pad * POOL * n_cols * 4                    # f32 matmul result (scratch)
        pooled = F_pad * n_cols * 4                        # f32 pooled slab (scratch)
        return 2 * (x_t + o_t + w_b + b_b) + act + pooled

    vmem_cap = _vmem_capacity_bytes()
    budget = int(0.45 * vmem_cap)                          # headroom for compiler scratch
    num_tc = _num_tensorcores()
    # Only force >=2 tiles on chips with 2 TensorCores (v7x megacore); on single-TC
    # chips extra grid steps are pure serial overhead and shrink the lane width.
    num_tiles = num_tc if (num_tc > 1 and B >= num_tc) else 1
    Bt = -(-B // num_tiles)
    while Bt > 1 and tile_bytes(Bt) > budget:
        num_tiles += 1
        Bt = -(-B // num_tiles)
    num_tiles = -(-B // Bt)
    B_pad = num_tiles * Bt
    n_cols = _round_up(Bt * T_pool, _LANE)                 # lane-dense pooled column width
    vmem_limit = int(min(int(0.98 * vmem_cap),
                         max(32 << 20, tile_bytes(Bt) + (4 << 20))))

    # ---- ONE shared im2col at k_max (wrapper side) ---------------------------------
    # cols[b, j*D + d, t] = x[b, d, t + j - P]  (zero outside [0, T-1]),  t < T_eff
    xp = jnp.pad(x, ((0, B_pad - B), (0, 0), (P, P)))      # (B_pad, D, T + 2P)
    cols = jnp.stack([xp[:, :, j:j + T_eff] for j in range(k_max)], axis=1)
    cols = cols.reshape(num_tiles, Bt, KD, T_pool, POOL)
    # column order (r, bt, p): pool offset slowest -> pooling is slab-wise in-kernel.
    cols = cols.transpose(0, 2, 4, 1, 3).reshape(num_tiles, KD, POOL, Bt * T_pool)
    if n_cols != Bt * T_pool:                              # lane-pad the (bt, p) axis
        cols = jnp.pad(cols, ((0, 0), (0, 0), (0, 0), (0, n_cols - Bt * T_pool)))
    cols = cols.reshape(num_tiles, KD, POOL * n_cols)
    if KD_pad != KD:                                       # sublane-pad the contraction dim
        cols = jnp.pad(cols, ((0, 0), (0, KD_pad - KD), (0, 0)))
    cols = cols.astype(compute_dtype)

    # ---- merged, zero-padded filter bank --------------------------------------------
    # W_merged[f, (j + P - k//2)*D + d] = W_torch[f, 0, d, j]  -> shared-padding conv
    # reproduces each width's own padding and the even-k index_select exactly.
    w_merged = jnp.zeros((F_pad, KD_pad), jnp.float32)
    b_all = jnp.zeros((F_pad, 1), jnp.float32)
    f_off = 0
    for (Wt, b), k in zip(params, widths):
        f_k = Wt.shape[0]
        col_off = (P - k // 2) * D
        w_flat = jnp.transpose(Wt[:, 0, :, :].astype(jnp.float32),
                               (0, 2, 1)).reshape(f_k, k * D)
        w_merged = w_merged.at[f_off:f_off + f_k, col_off:col_off + k * D].set(w_flat)
        b_all = b_all.at[f_off:f_off + f_k, 0].set(b.astype(jnp.float32))
        f_off += f_k
    w_merged = w_merged.astype(compute_dtype)

    # ---- one fused pallas_call over batch tiles --------------------------------------
    kernel = functools.partial(_fused_kernel, n_cols=n_cols)
    flops = 2 * F_pad * KD_pad * POOL * n_cols * num_tiles
    bytes_accessed = (num_tiles * KD_pad * POOL * n_cols * itemsize   # im2col
                      + F_pad * KD_pad * itemsize + F_pad * 4         # weights + bias
                      + num_tiles * F_pad * n_cols * 4)               # output

    out = pl.pallas_call(
        kernel,
        out_shape=jax.ShapeDtypeStruct((num_tiles, F_pad, n_cols), jnp.float32),
        grid=(num_tiles,),
        in_specs=[
            pl.BlockSpec((1, KD_pad, POOL * n_cols), lambda i: (i, 0, 0)),
            pl.BlockSpec((F_pad, KD_pad), lambda i: (0, 0)),
            pl.BlockSpec((F_pad, 1), lambda i: (0, 0)),
        ],
        out_specs=pl.BlockSpec((1, F_pad, n_cols), lambda i: (i, 0, 0)),
        compiler_params=pltpu.CompilerParams(
            dimension_semantics=("parallel",),
            vmem_limit_bytes=vmem_limit,
        ),
        cost_estimate=pl.CostEstimate(flops=int(flops), transcendentals=0,
                                      bytes_accessed=int(bytes_accessed)),
    )(cols, w_merged, b_all)

    # (num_tiles, F_pad, n_cols) -> strip padding -> (B, sum F_k, 1, T_pool)
    out = out[:, :f_total, :Bt * T_pool].reshape(num_tiles, f_total, Bt, T_pool)
    out = out.transpose(0, 2, 1, 3).reshape(B_pad, f_total, T_pool)[:B]
    return out[:, :, None, :]


def cnn_encoder_reference(x4d, params, filter_widths, seq_len):
    """Pure-JAX f32 replica of the PyTorch forward (for verification)."""
    x = x4d[:, 0, :, :].astype(jnp.float32)
    B, D, T = x.shape
    Tp = T // POOL
    outs = []
    for (Wt, b), k in zip(params, filter_widths):
        pad = k // 2
        xp = jnp.pad(x, ((0, 0), (0, 0), (pad, pad)))
        f_k = Wt.shape[0]
        acc = jnp.zeros((B, f_k, T), jnp.float32)
        for j in range(k):
            acc = acc + jnp.einsum("fd,bdt->bft", Wt[:, 0, :, j], xp[:, :, j:j + T])
        acc = jax.nn.relu(acc + b[None, :, None].astype(jnp.float32))
        pooled = acc[:, :, :Tp * POOL].reshape(B, f_k, Tp, POOL).max(axis=-1)
        outs.append(pooled)
    return jnp.concatenate(outs, axis=1)[:, :, None, :]


if __name__ == "__main__":
    # Small, forward-consistent shapes.
    B = 2
    char_embedding_dim = 8      # D (conv kernel spans the full embedding dim)
    seq_len = 20                # T; MaxPool1d(5) -> pooled length 4
    filter_widths = [2, 3]      # mixes even (index_select path) and odd widths
    num_filters_per_width = [8, 16]

    key = jax.random.PRNGKey(0)
    kx, *kp = jax.random.split(key, 1 + 2 * len(filter_widths))

    # Input in PyTorch NCHW convention: (B, 1, D, T).
    x4d = jax.random.normal(kx, (B, 1, char_embedding_dim, seq_len), dtype=jnp.float32)

    # Parameters in the real PyTorch Conv2d(1, F, (D, k)) layout: weight (F, 1, D, k).
    params = []
    for i, (k, F) in enumerate(zip(filter_widths, num_filters_per_width)):
        kw, kb = kp[2 * i], kp[2 * i + 1]
        W = 0.1 * jax.random.normal(kw, (F, 1, char_embedding_dim, k), dtype=jnp.float32)
        b = 0.1 * jax.random.normal(kb, (F,), dtype=jnp.float32)
        params.append((W, b))

    ref = cnn_encoder_reference(x4d, params, filter_widths, seq_len)

    # f32 operand path: tight numerical check against the PyTorch-equivalent reference.
    out_f32 = jax.block_until_ready(
        cnn_encoder_forward(x4d, params, filter_widths, seq_len,
                            compute_dtype=jnp.float32))
    assert out_f32.shape == (B, sum(num_filters_per_width), 1, seq_len // POOL), out_f32.shape
    assert jnp.allclose(out_f32, ref, atol=1e-4, rtol=1e-4), float(jnp.abs(out_f32 - ref).max())

    # bf16 MXU operand path (default; f32 accumulation): checked loosely vs the reference.
    out_bf16 = jax.block_until_ready(
        cnn_encoder_forward(x4d, params, filter_widths, seq_len,
                            compute_dtype=jnp.bfloat16))
    assert out_bf16.shape == out_f32.shape
    assert jnp.allclose(out_bf16, ref, atol=5e-2, rtol=5e-2), float(jnp.abs(out_bf16 - ref).max())

    print("KERNEL_OK")
</pallas_src>

<mosaic_0001>
module attributes {stable_mosaic.version = 11 : i64} {
  func.func @_fused_kernel(%arg0: i32, %arg1: memref<1x24x640xf32, #tpu.memory_space<vmem>>, %arg2: memref<24x24xf32, #tpu.memory_space<vmem>>, %arg3: memref<24x1xf32, #tpu.memory_space<vmem>>, %arg4: memref<1x24x128xf32, #tpu.memory_space<vmem>>) attributes {dimension_semantics = [#tpu.dimension_semantics<parallel>], iteration_bounds = array<i64: 1>, scalar_prefetch = 0 : i64, scratch_operands = 0 : i64, tpu.core_type = #tpu.core_type<tc>, window_params = [{transform_indices = @transform_0, window_bounds = array<i64: 1, 24, 640>}, {pipeline_mode = #tpu.pipeline_mode<synchronous>, transform_indices = @transform_1, window_bounds = array<i64: 24, 24>}, {pipeline_mode = #tpu.pipeline_mode<synchronous>, transform_indices = @transform_2, window_bounds = array<i64: 24, 1>}, {transform_indices = @transform_3, window_bounds = array<i64: 1, 24, 128>}]} {
    %c0 = arith.constant 0 : index
    %c0_0 = arith.constant 0 : index
    %0 = vector.load %arg2[%c0, %c0_0] : memref<24x24xf32, #tpu.memory_space<vmem>>, vector<24x24xf32>
    %c0_1 = arith.constant 0 : index
    %c0_2 = arith.constant 0 : index
    %c0_3 = arith.constant 0 : index
    %1 = vector.load %arg1[%c0_1, %c0_2, %c0_3] : memref<1x24x640xf32, #tpu.memory_space<vmem>>, vector<1x24x640xf32>
    %2 = vector.shape_cast %1 : vector<1x24x640xf32> to vector<24x640xf32>
    %cst = arith.constant dense<0.000000e+00> : vector<24x640xf32>
    %3 = tpu.matmul %0, %2, %cst {dimension_numbers = #tpu.dot_dimension_numbers<[1], [0], [0], [1], [0, 0, 1, 1], [], []>} : vector<24x24xf32>, vector<24x640xf32>, vector<24x640xf32> -> vector<24x640xf32>
    %4 = vector.extract_strided_slice %3 {offsets = [0, 0], sizes = [24, 128], strides = [1, 1]} : vector<24x640xf32> to vector<24x128xf32>
    %5 = vector.extract_strided_slice %3 {offsets = [0, 128], sizes = [24, 128], strides = [1, 1]} : vector<24x640xf32> to vector<24x128xf32>
    %6 = arith.maximumf %4, %5 : vector<24x128xf32>
    %7 = vector.extract_strided_slice %3 {offsets = [0, 256], sizes = [24, 128], strides = [1, 1]} : vector<24x640xf32> to vector<24x128xf32>
    %8 = arith.maximumf %6, %7 : vector<24x128xf32>
    %9 = vector.extract_strided_slice %3 {offsets = [0, 384], sizes = [24, 128], strides = [1, 1]} : vector<24x640xf32> to vector<24x128xf32>
    %10 = arith.maximumf %8, %9 : vector<24x128xf32>
    %11 = vector.extract_strided_slice %3 {offsets = [0, 512], sizes = [24, 128], strides = [1, 1]} : vector<24x640xf32> to vector<24x128xf32>
    %12 = arith.maximumf %10, %11 : vector<24x128xf32>
    %c0_4 = arith.constant 0 : index
    %c0_5 = arith.constant 0 : index
    %13 = vector.load %arg3[%c0_4, %c0_5] : memref<24x1xf32, #tpu.memory_space<vmem>>, vector<24x1xf32>
    %14 = vector.broadcast %13 : vector<24x1xf32> to vector<24x128xf32>
    %15 = arith.addf %12, %14 : vector<24x128xf32>
    %cst_6 = arith.constant 0.000000e+00 : f32
    %16 = vector.broadcast %cst_6 : f32 to vector<24x128xf32>
    %17 = arith.maximumf %15, %16 : vector<24x128xf32>
    %c0_7 = arith.constant 0 : index
    %c0_8 = arith.constant 0 : index
    %c0_9 = arith.constant 0 : index
    %18 = vector.load %arg4[%c0_7, %c0_8, %c0_9] : memref<1x24x128xf32, #tpu.memory_space<vmem>>, vector<1x24x128xf32>
    %19 = vector.shape_cast %18 : vector<1x24x128xf32> to vector<24x128xf32>
    %20 = vector.shape_cast %17 : vector<24x128xf32> to vector<1x24x128xf32>
    tpu.vector_store %arg4[%c0_7, %c0_8, %c0_9], %20 {strides = array<i32>} : memref<1x24x128xf32, #tpu.memory_space<vmem>>, vector<1x24x128xf32>,
    return
  }
  func.func @transform_0(%arg0: i32) -> (i32, i32, i32) {
    %c0_i32 = arith.constant 0 : i32
    %c0_i32_0 = arith.constant 0 : i32
    %c0_i32_1 = arith.constant 0 : i32
    return %arg0, %c0_i32, %c0_i32_0 : i32, i32, i32
  }
  func.func @transform_1(%arg0: i32) -> (i32, i32) {
    %c0_i32 = arith.constant 0 : i32
    %c0_i32_0 = arith.constant 0 : i32
    %c0_i32_1 = arith.constant 0 : i32
    return %c0_i32, %c0_i32_0 : i32, i32
  }
  func.func @transform_2(%arg0: i32) -> (i32, i32) {
    %c0_i32 = arith.constant 0 : i32
    %c0_i32_0 = arith.constant 0 : i32
    %c0_i32_1 = arith.constant 0 : i32
    return %c0_i32, %c0_i32_0 : i32, i32
  }
  func.func @transform_3(%arg0: i32) -> (i32, i32, i32) {
    %c0_i32 = arith.constant 0 : i32
    %c0_i32_0 = arith.constant 0 : i32
    %c0_i32_1 = arith.constant 0 : i32
    return %arg0, %c0_i32, %c0_i32_0 : i32, i32, i32
  }
}

</mosaic_0001>

<llo_original>
// kernel: tpu_custom_call.1
$region0: #{tpu_custom_call.1}
  #allocation0 [shape = 'u32[]', space=smem, size = 0x4, offset = 0x4, fixed_abs, tag = 'smem constant byte address 0x4 - core index']
  #allocation1 [shape = 'u32[144,128]{1,0:T(1,128)}', space=vmem, size = 0x12000, scoped, tag = 'internal scratch']
  %s0 = inlined_call_operand.hbm [shape: f32[1,24,640], index: 0, kind: input, shape index: {}]
  %s1 = inlined_call_operand.vmem [shape: f32[24,24], index: 1, kind: input, shape index: {}]
  %s2 = inlined_call_operand.vmem [shape: f32[24,1], index: 2, kind: input, shape index: {}]
  %s3 = inlined_call_operand.hbm [shape: f32[1,24,128], index: 3, kind: output, shape index: {}]
  %s4 = sld [smem:[#allocation0]]
  $region26: #{tpu_custom_call.1} parent=0
    _
  %s6 = ssub.s32 1, %s4
  %s7 = scalar_select 0, %s6, %s4
  $region1: #{tpu_custom_call.1} parent=0
    #allocation2 [shape = 'u8[61440]{0}', space=vmem, size = 0xf000, scoped, tag = 'input window, operand 0, single buffered']
    #allocation3 [shape = 's32[1]{0}', space=sflag, size = 0x4, scoped, tag = 'scoped memory for tpu_custom_call.1']
    #allocation4 [shape = 's32[1]{0}', space=sflag, size = 0x4, scoped, tag = 'scoped memory for tpu_custom_call.1']
    #allocation5 [shape = 'u8[12288]{0}', space=vmem, size = 0x3000, scoped, tag = 'output window, operand 0, single buffered']
    %8 = vsyncpa [#allocation3], 0
    %9 = vsyncpa [#allocation4], 0
    // Predicated region
    $region2: #{tpu_custom_call.1} parent=1 // pred_check
      _
    $region3: #{tpu_custom_call.1} parent=1 // pred_check_branch
      %11 = sbr.rel (0) target = $region5
    $region4: #{tpu_custom_call.1} parent=1 // pred_region
      %s13 = ssub.s32 1920, 1920
      %14 = vsyncadd [#allocation3], %s13
      %s15 = sshll.u32 [#allocation2], 4
      %s16 = int_to_ptr.vmem [resolvable:$true] %s15
      %21 = dma.hbm_to_vmem [thread:$0]  %s0, 1920, %s16, [#allocation3], 640, 640, 40
    $region5: #{tpu_custom_call.1} parent=1 // pred_fallthru
      _
    // Predicated region
    $region6: #{tpu_custom_call.1} parent=1 // pred_check
      _
    $region7: #{tpu_custom_call.1} parent=1 // pred_check_branch
      %23 = sbr.rel (0) target = $region9
    $region8: #{tpu_custom_call.1} parent=1 // pred_region
      _
    $region9: #{tpu_custom_call.1} parent=1 // pred_fallthru
      _
    // Predicated region
    $region10: #{tpu_custom_call.1} parent=1 // pred_check
      _
    $region11: #{tpu_custom_call.1} parent=1 // pred_check_branch
      %25 = sbr.rel (0) target = $region13
    $region12: #{tpu_custom_call.1} parent=1 // pred_region
      _
    $region13: #{tpu_custom_call.1} parent=1 // pred_fallthru
      _
    // Predicated region
    $region14: #{tpu_custom_call.1} parent=1 // pred_check
      _
    $region15: #{tpu_custom_call.1} parent=1 // pred_check_branch
      %27 = sbr.rel (0) target = $region17
    $region16: #{tpu_custom_call.1} parent=1 // pred_region
      %28 = dma.done [#allocation3], 1920
    $region17: #{tpu_custom_call.1} parent=1 // pred_fallthru
      _
    %v29 = vld [vmem:[%s1] sm:$0xff]
    %v30 = vld [vmem:[%s1 + $0x8] sm:$0xff]
    %v31 = vld [vmem:[%s1 + $0x10] sm:$0xff]
    %v32 = vld [vmem:[#allocation2] sm:$0xff]
    %v33 = vld [vmem:[#allocation2 + $0x8] sm:$0xff]
    %v34 = vld [vmem:[#allocation2 + $0x10] sm:$0xff]
    %v35 = vld [vmem:[#allocation2 + $0x18] sm:$0xff]
    %v36 = vld [vmem:[#allocation2 + $0x20] sm:$0xff]
    %v37 = vld [vmem:[#allocation2 + $0x28] sm:$0xff]
    %v38 = vld [vmem:[#allocation2 + $0x30] sm:$0xff]
    %v39 = vld [vmem:[#allocation2 + $0x38] sm:$0xff]
    %v40 = vld [vmem:[#allocation2 + $0x40] sm:$0xff]
    %v41 = vld [vmem:[#allocation2 + $0x48] sm:$0xff]
    %v42 = vld [vmem:[#allocation2 + $0x50] sm:$0xff]
    %v43 = vld [vmem:[#allocation2 + $0x58] sm:$0xff]
    %v44 = vld [vmem:[#allocation2 + $0x60] sm:$0xff]
    %v45 = vld [vmem:[#allocation2 + $0x68] sm:$0xff]
    %v46 = vld [vmem:[#allocation2 + $0x70] sm:$0xff]
    %vm47 = vcmask 195584
    %v49 = vsel %vm47, %v29, 0
    %v52 = vsel %vm47, %v30, 0
    %v55 = vsel %vm47, %v31, 0
    %57 = vmatprep.subr.mxu0 0.0
    %58 = vmatpush1.msra.mxu0 0.0
    %59 = vmatprep.subr.mxu0 0.0
    %60 = vmatpush1.msra.mxu0 0.0
    %61 = vmatprep.subr.mxu0 0.0
    %62 = vmatpush1.msra.mxu0 0.0
    %63 = vmatprep.subr.mxu0 0.0
    %64 = vmatpush1.msra.mxu0 0.0
    %65 = vmatprep.subr.mxu0 0.0
    %66 = vmatpush1.msra.mxu0 0.0
    %67 = vmatprep.subr.mxu0 0.0
    %68 = vmatpush1.msra.mxu0 0.0
    %69 = vmatprep.subr.mxu0 0.0
    %70 = vmatpush1.msra.mxu0 0.0
    %71 = vmatprep.subr.mxu0 0.0
    %72 = vmatpush1.msra.mxu0 0.0
    %73 = vmatprep.subr.mxu0 0.0
    %74 = vmatpush1.msra.mxu0 0.0
    %75 = vmatprep.subr.mxu0 0.0
    %76 = vmatpush1.msra.mxu0 0.0
    %77 = vmatprep.subr.mxu0 0.0
    %78 = vmatpush1.msra.mxu0 0.0
    %79 = vmatprep.subr.mxu0 0.0
    %80 = vmatpush1.msra.mxu0 0.0
    %81 = vmatprep.subr.mxu0 0.0
    %82 = vmatpush1.msra.mxu0 0.0
    %83 = vmatprep.subr.mxu0 %v43
    %84 = vmatpush1.msra.mxu0 %v42
    %85 = vmatprep.subr.mxu0 %v38
    %86 = vmatpush1.msra.mxu0 %v37
    %87 = vmatprep.subr.mxu0 %v33
    %88 = vmatpush1.msra.mxu0 %v32
    %89 = vmatprep.subr.mxu0 0.0
    %90 = vmatpush2.msra.mxu0 0.0
    %91 = vmatprep.subr.mxu0 0.0
    %92 = vmatpush2.msra.mxu0 0.0
    %93 = vmatprep.subr.mxu0 0.0
    %94 = vmatpush2.msra.mxu0 0.0
    %95 = vmatprep.subr.mxu0 0.0
    %96 = vmatpush2.msra.mxu0 0.0
    %97 = vmatprep.subr.mxu0 0.0
    %98 = vmatpush2.msra.mxu0 0.0
    %99 = vmatprep.subr.mxu0 0.0
    %100 = vmatpush2.msra.mxu0 0.0
    %101 = vmatprep.subr.mxu0 0.0
    %102 = vmatpush2.msra.mxu0 0.0
    %103 = vmatprep.subr.mxu0 0.0
    %104 = vmatpush2.msra.mxu0 0.0
    %105 = vmatprep.subr.mxu0 0.0
    %106 = vmatpush2.msra.mxu0 0.0
    %107 = vmatprep.subr.mxu0 0.0
    %108 = vmatpush2.msra.mxu0 0.0
    %109 = vmatprep.subr.mxu0 0.0
    %110 = vmatpush2.msra.mxu0 0.0
    %111 = vmatprep.subr.mxu0 0.0
    %112 = vmatpush2.msra.mxu0 0.0
    %113 = vmatprep.subr.mxu0 0.0
    %114 = vmatpush2.msra.mxu0 0.0
    %115 = vmatprep.subr.mxu0 0.0
    %116 = vmatpush2.msra.mxu0 0.0
    %117 = vmatprep.subr.mxu0 0.0
    %118 = vmatpush2.msra.mxu0 0.0
    %119 = vmatprep.subr.mxu0 0.0
    %120 = vmatpush2.msra.mxu0 0.0
    %121 = vmatprep.mubr.f32.mxu0 0.0
    %122 = vmatmul.mubr.f32.gmra.mxu0 %v49
    %v123 = vpop.f32.mrf.mxu0
    %v124 = vadd.f32 0.0, %v123
    %v125 = vpop.f32.mrf.mxu0
    %v126 = vadd.f32 0.0, %v125
    %127 = vmatprep.mubr.f32.mxu0 0.0
    %128 = vmatmul.mubr.f32.gmra.mxu0 %v52
    %v129 = vpop.f32.mrf.mxu0
    %v130 = vadd.f32 0.0, %v129
    %v131 = vpop.f32.mrf.mxu0
    %v132 = vadd.f32 0.0, %v131
    %133 = vmatprep.mubr.f32.mxu0 0.0
    %134 = vmatmul.mubr.f32.gmra.mxu0 %v55
    %v135 = vpop.f32.mrf.mxu0
    %v136 = vadd.f32 0.0, %v135
    %v137 = vpop.f32.mrf.mxu0
    %v138 = vadd.f32 0.0, %v137
    %139 = vdwg.mxu0
    %140 = vmatprep.subr.mxu0 0.0
    %141 = vmatpush1.msra.mxu0 0.0
    %142 = vmatprep.subr.mxu0 0.0
    %143 = vmatpush1.msra.mxu0 0.0
    %144 = vmatprep.subr.mxu0 0.0
    %145 = vmatpush1.msra.mxu0 0.0
    %146 = vmatprep.subr.mxu0 0.0
    %147 = vmatpush1.msra.mxu0 0.0
    %148 = vmatprep.subr.mxu0 0.0
    %149 = vmatpush1.msra.mxu0 0.0
    %150 = vmatprep.subr.mxu0 0.0
    %151 = vmatpush1.msra.mxu0 0.0
    %152 = vmatprep.subr.mxu0 0.0
    %153 = vmatpush1.msra.mxu0 0.0
    %154 = vmatprep.subr.mxu0 0.0
    %155 = vmatpush1.msra.mxu0 0.0
    %156 = vmatprep.subr.mxu0 0.0
    %157 = vmatpush1.msra.mxu0 0.0
    %158 = vmatprep.subr.mxu0 0.0
    %159 = vmatpush1.msra.mxu0 0.0
    %160 = vmatprep.subr.mxu0 0.0
    %161 = vmatpush1.msra.mxu0 0.0
    %162 = vmatprep.subr.mxu0 0.0
    %163 = vmatpush1.msra.mxu0 0.0
    %164 = vmatprep.subr.mxu0 0.0
    %165 = vmatpush1.msra.mxu0 0.0
    %166 = vmatprep.subr.mxu0 %v45
    %167 = vmatpush1.msra.mxu0 %v44
    %168 = vmatprep.subr.mxu0 %v40
    %169 = vmatpush1.msra.mxu0 %v39
    %170 = vmatprep.subr.mxu0 %v35
    %171 = vmatpush1.msra.mxu0 %v34
    %172 = vmatprep.subr.mxu0 0.0
    %173 = vmatpush2.msra.mxu0 0.0
    %174 = vmatprep.subr.mxu0 0.0
    %175 = vmatpush2.msra.mxu0 0.0
    %176 = vmatprep.subr.mxu0 0.0
    %177 = vmatpush2.msra.mxu0 0.0
    %178 = vmatprep.subr.mxu0 0.0
    %179 = vmatpush2.msra.mxu0 0.0
    %180 = vmatprep.subr.mxu0 0.0
    %181 = vmatpush2.msra.mxu0 0.0
    %182 = vmatprep.subr.mxu0 0.0
    %183 = vmatpush2.msra.mxu0 0.0
    %184 = vmatprep.subr.mxu0 0.0
    %185 = vmatpush2.msra.mxu0 0.0
    %186 = vmatprep.subr.mxu0 0.0
    %187 = vmatpush2.msra.mxu0 0.0
    %188 = vmatprep.subr.mxu0 0.0
    %189 = vmatpush2.msra.mxu0 0.0
    %190 = vmatprep.subr.mxu0 0.0
    %191 = vmatpush2.msra.mxu0 0.0
    %192 = vmatprep.subr.mxu0 0.0
    %193 = vmatpush2.msra.mxu0 0.0
    %194 = vmatprep.subr.mxu0 0.0
    %195 = vmatpush2.msra.mxu0 0.0
    %196 = vmatprep.subr.mxu0 0.0
    %197 = vmatpush2.msra.mxu0 0.0
    %198 = vmatprep.subr.mxu0 0.0
    %199 = vmatpush2.msra.mxu0 0.0
    %200 = vmatprep.subr.mxu0 0.0
    %201 = vmatpush2.msra.mxu0 0.0
    %202 = vmatprep.subr.mxu0 0.0
    %203 = vmatpush2.msra.mxu0 0.0
    %204 = vmatprep.mubr.f32.mxu0 0.0
    %205 = vmatmul.mubr.f32.gmra.mxu0 %v49
    %v206 = vpop.f32.mrf.mxu0
    %v207 = vadd.f32 0.0, %v206
    %v208 = vpop.f32.mrf.mxu0
    %v209 = vadd.f32 0.0, %v208
    %210 = vmatprep.mubr.f32.mxu0 0.0
    %211 = vmatmul.mubr.f32.gmra.mxu0 %v52
    %v212 = vpop.f32.mrf.mxu0
    %v213 = vadd.f32 0.0, %v212
    %v214 = vpop.f32.mrf.mxu0
    %v215 = vadd.f32 0.0, %v214
    %216 = vmatprep.mubr.f32.mxu0 0.0
    %217 = vmatmul.mubr.f32.gmra.mxu0 %v55
    %v218 = vpop.f32.mrf.mxu0
    %v219 = vadd.f32 0.0, %v218
    %v220 = vpop.f32.mrf.mxu0
    %v221 = vadd.f32 0.0, %v220
    %222 = vdwg.mxu0
    %223 = vmatprep.subr.mxu0 0.0
    %224 = vmatpush1.msra.mxu0 0.0
    %225 = vmatprep.subr.mxu0 0.0
    %226 = vmatpush1.msra.mxu0 0.0
    %227 = vmatprep.subr.mxu0 0.0
    %228 = vmatpush1.msra.mxu0 0.0
    %229 = vmatprep.subr.mxu0 0.0
    %230 = vmatpush1.msra.mxu0 0.0
    %231 = vmatprep.subr.mxu0 0.0
    %232 = vmatpush1.msra.mxu0 0.0
    %233 = vmatprep.subr.mxu0 0.0
    %234 = vmatpush1.msra.mxu0 0.0
    %235 = vmatprep.subr.mxu0 0.0
    %236 = vmatpush1.msra.mxu0 0.0
    %237 = vmatprep.subr.mxu0 0.0
    %238 = vmatpush1.msra.mxu0 0.0
    %239 = vmatprep.subr.mxu0 0.0
    %240 = vmatpush1.msra.mxu0 0.0
    %241 = vmatprep.subr.mxu0 0.0
    %242 = vmatpush1.msra.mxu0 0.0
    %243 = vmatprep.subr.mxu0 0.0
    %244 = vmatpush1.msra.mxu0 0.0
    %245 = vmatprep.subr.mxu0 0.0
    %246 = vmatpush1.msra.mxu0 0.0
    %247 = vmatprep.subr.mxu0 0.0
    %248 = vmatpush1.msra.mxu0 0.0
    %249 = vmatprep.subr.mxu0 0.0
    %250 = vmatpush1.msra.mxu0 %v46
    %251 = vmatprep.subr.mxu0 0.0
    %252 = vmatpush1.msra.mxu0 %v41
    %253 = vmatprep.subr.mxu0 0.0
    %254 = vmatpush1.msra.mxu0 %v36
    %255 = vmatprep.subr.mxu0 0.0
    %256 = vmatpush2.msra.mxu0 0.0
    %257 = vmatprep.subr.mxu0 0.0
    %258 = vmatpush2.msra.mxu0 0.0
    %259 = vmatprep.subr.mxu0 0.0
    %260 = vmatpush2.msra.mxu0 0.0
    %261 = vmatprep.subr.mxu0 0.0
    %262 = vmatpush2.msra.mxu0 0.0
    %263 = vmatprep.subr.mxu0 0.0
    %264 = vmatpush2.msra.mxu0 0.0
    %265 = vmatprep.subr.mxu0 0.0
    %266 = vmatpush2.msra.mxu0 0.0
    %267 = vmatprep.subr.mxu0 0.0
    %268 = vmatpush2.msra.mxu0 0.0
    %269 = vmatprep.subr.mxu0 0.0
    %270 = vmatpush2.msra.mxu0 0.0
    %271 = vmatprep.subr.mxu0 0.0
    %272 = vmatpush2.msra.mxu0 0.0
    %273 = vmatprep.subr.mxu0 0.0
    %274 = vmatpush2.msra.mxu0 0.0
    %275 = vmatprep.subr.mxu0 0.0
    %276 = vmatpush2.msra.mxu0 0.0
    %277 = vmatprep.subr.mxu0 0.0
    %278 = vmatpush2.msra.mxu0 0.0
    %279 = vmatprep.subr.mxu0 0.0
    %280 = vmatpush2.msra.mxu0 0.0
    %281 = vmatprep.subr.mxu0 0.0
    %282 = vmatpush2.msra.mxu0 0.0
    %283 = vmatprep.subr.mxu0 0.0
    %284 = vmatpush2.msra.mxu0 0.0
    %285 = vmatprep.subr.mxu0 0.0
    %286 = vmatpush2.msra.mxu0 0.0
    %287 = vmatprep.mubr.f32.mxu0 0.0
    %288 = vmatmul.mubr.f32.gmra.mxu0 %v49
    %v289 = vpop.f32.mrf.mxu0
    %v290 = vadd.f32 0.0, %v289
    %v291 = vpop.f32.mrf.mxu0
    %292 = vmatprep.mubr.f32.mxu0 0.0
    %293 = vmatmul.mubr.f32.gmra.mxu0 %v52
    %v294 = vpop.f32.mrf.mxu0
    %v295 = vadd.f32 0.0, %v294
    %v296 = vpop.f32.mrf.mxu0
    %297 = vmatprep.mubr.f32.mxu0 0.0
    %298 = vmatmul.mubr.f32.gmra.mxu0 %v55
    %v299 = vpop.f32.mrf.mxu0
    %v300 = vadd.f32 0.0, %v299
    %v301 = vpop.f32.mrf.mxu0
    %302 = vdwg.mxu0
    %v303 = vmax.f32 %v124, %v126
    %v304 = vmax.f32 %v130, %v132
    %v305 = vmax.f32 %v136, %v138
    %v306 = vmax.f32 %v303, %v207
    %v307 = vmax.f32 %v304, %v213
    %v308 = vmax.f32 %v305, %v219
    %v309 = vmax.f32 %v306, %v209
    %v310 = vmax.f32 %v307, %v215
    %v311 = vmax.f32 %v308, %v221
    %v312 = vmax.f32 %v309, %v290
    %v313 = vmax.f32 %v310, %v295
    %v314 = vmax.f32 %v311, %v300
    %v315 = vld [vmem:[%s2] sm:$0xff]
    %v316 = vld [vmem:[%s2 + $0x8] sm:$0xff]
    %v317 = vld [vmem:[%s2 + $0x10] sm:$0xff]
    %319 = vset.pattern.permute.xlu0 0
    %320 = vperm.xlu0 %319, %v315
    %v321 = vpop.permute.xlu0 %320
    %324 = vset.pattern.permute.xlu0 0
    %325 = vperm.xlu0 %324, %v316
    %v326 = vpop.permute.xlu0 %325
    %329 = vset.pattern.permute.xlu0 0
    %330 = vperm.xlu0 %329, %v317
    %v331 = vpop.permute.xlu0 %330
    %v333 = vadd.f32 %v312, %v321
    %v334 = vadd.f32 %v313, %v326
    %v335 = vadd.f32 %v314, %v331
    %v336 = vmax.f32 %v333, 0.0
    %v337 = vmax.f32 %v334, 0.0
    %v338 = vmax.f32 %v335, 0.0
    %339 = vst [vmem:[#allocation5] sm:$0xff] %v336
    %340 = vst [vmem:[#allocation5 + $0x8] sm:$0xff] %v337
    %341 = vst [vmem:[#allocation5 + $0x10] sm:$0xff] %v338
    // Predicated region
    $region18: #{tpu_custom_call.1} parent=1 // pred_check
      _
    $region19: #{tpu_custom_call.1} parent=1 // pred_check_branch
      %343 = sbr.rel (0) target = $region21
    $region20: #{tpu_custom_call.1} parent=1 // pred_region
      %s345 = ssub.s32 384, 384
      %346 = vsyncadd [#allocation4], %s345
      %s347 = sshll.u32 [#allocation5], 4
      %s348 = int_to_ptr.vmem [resolvable:$true] %s347
      %353 = dma.vmem_to_hbm [thread:$0]  %s348, 384, %s3, [#allocation4], 128, 128, 8
    $region21: #{tpu_custom_call.1} parent=1 // pred_fallthru
      _
    // Predicated region
    $region22: #{tpu_custom_call.1} parent=1 // pred_check
      _
    $region23: #{tpu_custom_call.1} parent=1 // pred_check_branch
      %355 = sbr.rel (0) target = $region25
    $region24: #{tpu_custom_call.1} parent=1 // pred_region
      %356 = dma.done [#allocation4], 384
    $region25: #{tpu_custom_call.1} parent=1 // pred_fallthru
      _
    %357 = vsyncpa [#allocation3], 1
    %358 = vsyncpa [#allocation4], 1

</llo_original>
